<compile_context>
chip_gen: v7x
topology: tpu7x:2x2x1
jax: 0.10.0
libtpu: 0.0.40
codegen_flags: <defaults>
</compile_context>

<pallas_src>
import jax
import jax.numpy as jnp
from jax.experimental import pallas as pl
from jax.experimental.pallas import tpu as pltpu


def _round_up(x, m):
    return (x + m - 1) // m * m


def _divisor_tile(total, cap, unit=128):
    """Largest multiple of `unit` that divides `total` and is <= cap."""
    cap = max(unit, min(cap, total))
    t = cap - cap % unit
    while t > unit:
        if total % t == 0:
            return t
        t -= unit
    return unit


def _vmem_capacity_bytes():
    try:
        return int(pltpu.get_tpu_info().vmem_capacity_bytes)
    except Exception:
        # Unknown runtime: assume the smallest current generation (v7x, 64 MiB).
        return 64 * 1024 * 1024


def _ffn_kernel_direct(x_ref, w1_ref, b1_ref, w2_ref, b2_ref, o_ref):
    """fc1 -> ReLU -> fc2, accumulating straight into the f32 output tile."""
    k = pl.program_id(1)

    @pl.when(k == 0)
    def _():
        o_ref[...] = jnp.zeros_like(o_ref)

    h = jnp.dot(x_ref[...], w1_ref[...], preferred_element_type=jnp.float32)
    h = jnp.maximum(h + b1_ref[...], 0.0)
    # TODO(synk): dropout is treated as eval-mode identity (no RNG masking).
    o_ref[...] += jnp.dot(h.astype(w2_ref.dtype), w2_ref[...],
                          preferred_element_type=jnp.float32)

    @pl.when(k == pl.num_programs(1) - 1)
    def _():
        o_ref[...] += b2_ref[...]


def _ffn_kernel_scratch(x_ref, w1_ref, b1_ref, w2_ref, b2_ref, o_ref, acc_ref):
    """Same, with an f32 VMEM accumulator for non-f32 output dtypes."""
    k = pl.program_id(1)

    @pl.when(k == 0)
    def _():
        acc_ref[...] = jnp.zeros_like(acc_ref)

    h = jnp.dot(x_ref[...], w1_ref[...], preferred_element_type=jnp.float32)
    h = jnp.maximum(h + b1_ref[...], 0.0)
    acc_ref[...] += jnp.dot(h.astype(w2_ref.dtype), w2_ref[...],
                            preferred_element_type=jnp.float32)

    @pl.when(k == pl.num_programs(1) - 1)
    def _():
        o_ref[...] = (acc_ref[...] + b2_ref[...]).astype(o_ref.dtype)


def positionwise_feedforward(x, w1, b1, w2, b2, *, tm=512, tk=512,
                             compute_dtype=None):
    """x: [B, S, H]; w1: [H, PF]; b1: [PF]; w2: [PF, H]; b2: [H].

    Weights are stored transposed vs. torch's nn.Linear ([in, out]) so the
    kernel runs plain row-major matmuls. `compute_dtype=jnp.bfloat16` casts
    x/w1/w2 for the MXU (recommended on v6e/v7x; ~1e-2 relative error vs f32);
    accumulation, bias add and ReLU stay in float32.
    """
    B, S, H = x.shape
    PF = w1.shape[1]
    out_dtype = x.dtype

    if compute_dtype is not None:
        x = x.astype(compute_dtype)
        w1 = w1.astype(compute_dtype)
        w2 = w2.astype(compute_dtype)
    b1 = b1.astype(jnp.float32)
    b2 = b2.astype(jnp.float32)

    cbytes = jnp.dtype(x.dtype).itemsize
    obytes = jnp.dtype(out_dtype).itemsize
    direct_out = out_dtype == jnp.float32

    M = B * S
    x2d = x.reshape(M, H)

    # Lane-dense padding: last dims presented to the kernel are multiples of 128.
    Hp = _round_up(H, 128)
    PFp = _round_up(PF, 128)          # NOT rounded to tk; tk chosen to divide PFp

    # --- tile selection ----------------------------------------------------
    Mp = _round_up(M, 8)
    small = Mp <= 512 and Hp <= 1024 and PFp <= 1024
    if small:
        # Tiny problems: one grid step; per-step pipeline overhead dominates.
        tm_eff, tk_eff = Mp, PFp
    else:
        tm_eff = min(_round_up(tm, 8), Mp)
        tk_eff = _divisor_tile(PFp, tk)
        # Keep >=2 M tiles so both v7x TensorCores get work on the parallel axis.
        if tm_eff == Mp and Mp >= 512:
            tm_eff = _round_up((Mp + 1) // 2, 8)

    # --- VMEM budget (generation aware) -------------------------------------
    vmem_cap = _vmem_capacity_bytes()
    budget = vmem_cap - 8 * 1024 * 1024          # headroom for compiler scratch

    def vmem_need(tm_, tk_, w_bufs):
        need = 2 * tm_ * Hp * cbytes                        # x tile (dbl-buffered over i)
        need += w_bufs * (Hp * tk_ + tk_ * Hp) * cbytes     # W1 + W2 tiles
        need += w_bufs * 8 * tk_ * 4 + 2 * 8 * Hp * 4       # biases (f32)
        need += 2 * tm_ * Hp * obytes                       # output tile
        if not direct_out:
            need += tm_ * Hp * 4                            # f32 accumulator scratch
        return need

    # Shrink tk first (halves weight-tile VMEM), then tm, until we fit.
    while vmem_need(tm_eff, tk_eff, 2) > budget and tk_eff > 256:
        tk_eff = _divisor_tile(PFp, tk_eff // 2)
    while vmem_need(tm_eff, tk_eff, 2) > budget and tm_eff > 256:
        tm_eff = _round_up(max(tm_eff // 2, 8), 8)

    # Deeper weight prefetch when the reduction axis is long and VMEM headroom
    # allows it (mainly v5e/v6e with 128 MiB physical VMEM).
    num_k = PFp // tk_eff
    w_bufs = 3 if (num_k >= 3 and vmem_need(tm_eff, tk_eff, 3) <= budget) else 2

    need = vmem_need(tm_eff, tk_eff, w_bufs)
    vmem_limit = int(min(budget, max(need * 5 // 4, 16 * 1024 * 1024)))
    vmem_limit = int(min(vmem_cap, max(vmem_limit, need)))

    # No partial M blocks: round M up to a multiple of tm (padded rows are zero
    # and sliced away at the end).
    Mp = _round_up(Mp, tm_eff)
    num_m = Mp // tm_eff

    # --- padding (skipped when H/PF already multiples of 128; for repeated
    # calls, pre-pad the weights once at init instead of per forward) ---------
    if (Mp, Hp) != (M, H):
        x2d = jnp.pad(x2d, ((0, Mp - M), (0, Hp - H)))
    if (Hp, PFp) != (H, PF):
        w1 = jnp.pad(w1, ((0, Hp - H), (0, PFp - PF)))
        w2 = jnp.pad(w2, ((0, PFp - PF), (0, Hp - H)))
    b1p = jnp.pad(b1, (0, PFp - PF)).reshape(1, PFp)
    b2p = jnp.pad(b2, (0, Hp - H)).reshape(1, Hp)

    cost = pl.CostEstimate(
        flops=4 * Mp * Hp * PFp,
        transcendentals=0,
        bytes_accessed=(Mp * Hp * cbytes                    # x read
                        + num_m * 2 * Hp * PFp * cbytes     # W1+W2 re-read per M tile
                        + num_m * (PFp + Hp) * 4            # biases
                        + Mp * Hp * obytes),                # output write
    )

    wspec_kwargs = {}
    if w_bufs != 2:
        wspec_kwargs = dict(pipeline_mode=pl.Buffered(w_bufs))
    in_specs = [
        pl.BlockSpec((tm_eff, Hp), lambda i, k: (i, 0)),                    # x (resident over k)
        pl.BlockSpec((Hp, tk_eff), lambda i, k: (0, k), **wspec_kwargs),    # W1 PF tile
        pl.BlockSpec((1, tk_eff), lambda i, k: (0, k)),                     # b1 PF tile
        pl.BlockSpec((tk_eff, Hp), lambda i, k: (k, 0), **wspec_kwargs),    # W2 PF tile
        pl.BlockSpec((1, Hp), lambda i, k: (0, 0)),                         # b2 (resident)
    ]

    if direct_out:
        kernel = _ffn_kernel_direct
        scratch = ()
    else:
        kernel = _ffn_kernel_scratch
        scratch = [pltpu.VMEM((tm_eff, Hp), jnp.float32)]

    out2d = pl.pallas_call(
        kernel,
        out_shape=jax.ShapeDtypeStruct((Mp, Hp), out_dtype),
        grid_spec=pltpu.PrefetchScalarGridSpec(
            num_scalar_prefetch=0,
            grid=(num_m, num_k),
            in_specs=in_specs,
            out_specs=pl.BlockSpec((tm_eff, Hp), lambda i, k: (i, 0)),
            scratch_shapes=scratch,
        ),
        compiler_params=pltpu.CompilerParams(
            dimension_semantics=("parallel", "arbitrary"),
            vmem_limit_bytes=vmem_limit,
        ),
        cost_estimate=cost,
    )(x2d, w1, b1p, w2, b2p)

    return out2d[:M, :H].reshape(B, S, H)


def reference_ffn(x, w1, b1, w2, b2):
    h = jnp.maximum(x @ w1 + b1, 0.0)
    return h @ w2 + b2


if __name__ == "__main__":
    # Small shapes consistent with the module's forward:
    # x: [batch=2, seq=8, hid_dim=32], pf_dim=64, dropout in eval mode.
    B, S, HID, PF = 2, 8, 32, 64
    key = jax.random.PRNGKey(0)
    kx, kw1, kb1, kw2, kb2 = jax.random.split(key, 5)

    x = jax.random.normal(kx, (B, S, HID), dtype=jnp.float32)
    # torch stores Linear weight as [out, in]; here we keep the transpose [in, out].
    w1 = jax.random.normal(kw1, (HID, PF), dtype=jnp.float32) * (1.0 / HID ** 0.5)
    b1 = jax.random.normal(kb1, (PF,), dtype=jnp.float32) * 0.1
    w2 = jax.random.normal(kw2, (PF, HID), dtype=jnp.float32) * (1.0 / PF ** 0.5)
    b2 = jax.random.normal(kb2, (HID,), dtype=jnp.float32) * 0.1

    ref = reference_ffn(x, w1, b1, w2, b2)

    # f32 path (accumulates directly into the output tile): exact check.
    out = positionwise_feedforward(x, w1, b1, w2, b2)
    jax.block_until_ready(out)
    assert out.shape == (B, S, HID)
    assert jnp.allclose(out, ref, atol=1e-5, rtol=1e-5), float(jnp.max(jnp.abs(out - ref)))

    # bf16-MXU path (recommended on v6e/v7x): bf16 inputs, f32 accumulation/output.
    out_bf16 = positionwise_feedforward(x, w1, b1, w2, b2, compute_dtype=jnp.bfloat16)
    jax.block_until_ready(out_bf16)
    assert out_bf16.shape == (B, S, HID)
    assert jnp.allclose(out_bf16, ref, atol=1e-1, rtol=1e-1)

    # bf16 in / bf16 out: exercises the scratch-accumulator kernel variant.
    out_b = positionwise_feedforward(x.astype(jnp.bfloat16), w1.astype(jnp.bfloat16),
                                     b1, w2.astype(jnp.bfloat16), b2)
    jax.block_until_ready(out_b)
    assert out_b.dtype == jnp.bfloat16 and out_b.shape == (B, S, HID)
    assert jnp.allclose(out_b.astype(jnp.float32), ref, atol=1.5e-1, rtol=1.5e-1)

    print("KERNEL_OK")
</pallas_src>

<mosaic_0001>
module attributes {stable_mosaic.version = 11 : i64} {
  func.func @_ffn_kernel_direct(%arg0: i32, %arg1: i32, %arg2: memref<16x128xf32, #tpu.memory_space<vmem>>, %arg3: memref<128x128xf32, #tpu.memory_space<vmem>>, %arg4: memref<1x128xf32, #tpu.memory_space<vmem>>, %arg5: memref<128x128xf32, #tpu.memory_space<vmem>>, %arg6: memref<1x128xf32, #tpu.memory_space<vmem>>, %arg7: memref<16x128xf32, #tpu.memory_space<vmem>>) attributes {dimension_semantics = [#tpu.dimension_semantics<parallel>, #tpu.dimension_semantics<arbitrary>], iteration_bounds = array<i64: 1, 1>, scalar_prefetch = 0 : i64, scratch_operands = 0 : i64, tpu.core_type = #tpu.core_type<tc>, window_params = [{transform_indices = @transform_0, window_bounds = array<i64: 16, 128>}, {transform_indices = @transform_1, window_bounds = array<i64: 128, 128>}, {transform_indices = @transform_2, window_bounds = array<i64: 1, 128>}, {transform_indices = @transform_3, window_bounds = array<i64: 128, 128>}, {pipeline_mode = #tpu.pipeline_mode<synchronous>, transform_indices = @transform_4, window_bounds = array<i64: 1, 128>}, {transform_indices = @transform_5, window_bounds = array<i64: 16, 128>}]} {
    %c0_i32 = arith.constant 0 : i32
    %0 = arith.cmpi eq, %arg1, %c0_i32 : i32
    %1 = arith.extui %0 : i1 to i32
    %c0_i32_0 = arith.constant 0 : i32
    %2 = arith.cmpi ne, %1, %c0_i32_0 : i32
    scf.if %2 {
      %cst_16 = arith.constant 0.000000e+00 : f32
      %19 = vector.broadcast %cst_16 : f32 to vector<16x128xf32>
      %c0_17 = arith.constant 0 : index
      %c0_18 = arith.constant 0 : index
      %20 = vector.load %arg7[%c0_17, %c0_18] : memref<16x128xf32, #tpu.memory_space<vmem>>, vector<16x128xf32>
      tpu.vector_store %arg7[%c0_17, %c0_18], %19 {strides = array<i32>} : memref<16x128xf32, #tpu.memory_space<vmem>>, vector<16x128xf32>,
    } else {
    }
    %c0 = arith.constant 0 : index
    %c0_1 = arith.constant 0 : index
    %3 = vector.load %arg2[%c0, %c0_1] : memref<16x128xf32, #tpu.memory_space<vmem>>, vector<16x128xf32>
    %c0_2 = arith.constant 0 : index
    %c0_3 = arith.constant 0 : index
    %4 = vector.load %arg3[%c0_2, %c0_3] : memref<128x128xf32, #tpu.memory_space<vmem>>, vector<128x128xf32>
    %cst = arith.constant dense<0.000000e+00> : vector<16x128xf32>
    %5 = tpu.matmul %3, %4, %cst {dimension_numbers = #tpu.dot_dimension_numbers<[1], [0], [0], [1], [0, 0, 1, 1], [], []>} : vector<16x128xf32>, vector<128x128xf32>, vector<16x128xf32> -> vector<16x128xf32>
    %c0_4 = arith.constant 0 : index
    %c0_5 = arith.constant 0 : index
    %6 = vector.load %arg4[%c0_4, %c0_5] : memref<1x128xf32, #tpu.memory_space<vmem>>, vector<1x128xf32>
    %7 = vector.broadcast %6 : vector<1x128xf32> to vector<16x128xf32>
    %8 = arith.addf %5, %7 : vector<16x128xf32>
    %cst_6 = arith.constant 0.000000e+00 : f32
    %9 = vector.broadcast %cst_6 : f32 to vector<16x128xf32>
    %10 = arith.maximumf %8, %9 : vector<16x128xf32>
    %c0_7 = arith.constant 0 : index
    %c0_8 = arith.constant 0 : index
    %11 = vector.load %arg7[%c0_7, %c0_8] : memref<16x128xf32, #tpu.memory_space<vmem>>, vector<16x128xf32>
    %c0_9 = arith.constant 0 : index
    %c0_10 = arith.constant 0 : index
    %12 = vector.load %arg5[%c0_9, %c0_10] : memref<128x128xf32, #tpu.memory_space<vmem>>, vector<128x128xf32>
    %cst_11 = arith.constant dense<0.000000e+00> : vector<16x128xf32>
    %13 = tpu.matmul %10, %12, %cst_11 {dimension_numbers = #tpu.dot_dimension_numbers<[1], [0], [0], [1], [0, 0, 1, 1], [], []>} : vector<16x128xf32>, vector<128x128xf32>, vector<16x128xf32> -> vector<16x128xf32>
    %14 = arith.addf %11, %13 : vector<16x128xf32>
    %c0_12 = arith.constant 0 : index
    %c0_13 = arith.constant 0 : index
    %15 = vector.load %arg7[%c0_12, %c0_13] : memref<16x128xf32, #tpu.memory_space<vmem>>, vector<16x128xf32>
    tpu.vector_store %arg7[%c0_12, %c0_13], %14 {strides = array<i32>} : memref<16x128xf32, #tpu.memory_space<vmem>>, vector<16x128xf32>,
    %c0_i32_14 = arith.constant 0 : i32
    %16 = arith.cmpi eq, %arg1, %c0_i32_14 : i32
    %17 = arith.extui %16 : i1 to i32
    %c0_i32_15 = arith.constant 0 : i32
    %18 = arith.cmpi ne, %17, %c0_i32_15 : i32
    scf.if %18 {
      %c0_16 = arith.constant 0 : index
      %c0_17 = arith.constant 0 : index
      %19 = vector.load %arg7[%c0_16, %c0_17] : memref<16x128xf32, #tpu.memory_space<vmem>>, vector<16x128xf32>
      %c0_18 = arith.constant 0 : index
      %c0_19 = arith.constant 0 : index
      %20 = vector.load %arg6[%c0_18, %c0_19] : memref<1x128xf32, #tpu.memory_space<vmem>>, vector<1x128xf32>
      %21 = vector.broadcast %20 : vector<1x128xf32> to vector<16x128xf32>
      %22 = arith.addf %19, %21 : vector<16x128xf32>
      %c0_20 = arith.constant 0 : index
      %c0_21 = arith.constant 0 : index
      %23 = vector.load %arg7[%c0_20, %c0_21] : memref<16x128xf32, #tpu.memory_space<vmem>>, vector<16x128xf32>
      tpu.vector_store %arg7[%c0_20, %c0_21], %22 {strides = array<i32>} : memref<16x128xf32, #tpu.memory_space<vmem>>, vector<16x128xf32>,
    } else {
    }
    return
  }
  func.func @transform_0(%arg0: i32, %arg1: i32) -> (i32, i32) {
    %c0_i32 = arith.constant 0 : i32
    %c0_i32_0 = arith.constant 0 : i32
    return %arg0, %c0_i32 : i32, i32
  }
  func.func @transform_1(%arg0: i32, %arg1: i32) -> (i32, i32) {
    %c0_i32 = arith.constant 0 : i32
    %c0_i32_0 = arith.constant 0 : i32
    return %c0_i32, %arg1 : i32, i32
  }
  func.func @transform_2(%arg0: i32, %arg1: i32) -> (i32, i32) {
    %c0_i32 = arith.constant 0 : i32
    %c0_i32_0 = arith.constant 0 : i32
    return %c0_i32, %arg1 : i32, i32
  }
  func.func @transform_3(%arg0: i32, %arg1: i32) -> (i32, i32) {
    %c0_i32 = arith.constant 0 : i32
    %c0_i32_0 = arith.constant 0 : i32
    return %arg1, %c0_i32 : i32, i32
  }
  func.func @transform_4(%arg0: i32, %arg1: i32) -> (i32, i32) {
    %c0_i32 = arith.constant 0 : i32
    %c0_i32_0 = arith.constant 0 : i32
    %c0_i32_1 = arith.constant 0 : i32
    return %c0_i32, %c0_i32_0 : i32, i32
  }
  func.func @transform_5(%arg0: i32, %arg1: i32) -> (i32, i32) {
    %c0_i32 = arith.constant 0 : i32
    %c0_i32_0 = arith.constant 0 : i32
    return %arg0, %c0_i32 : i32, i32
  }
}

</mosaic_0001>

<llo_original>
// kernel: tpu_custom_call.1
$region0: #{tpu_custom_call.1}
  #allocation0 [shape = 'u32[]', space=smem, size = 0x4, offset = 0x4, fixed_abs, tag = 'smem constant byte address 0x4 - core index']
  #allocation1 [shape = 'u32[144,128]{1,0:T(1,128)}', space=vmem, size = 0x12000, scoped, tag = 'internal scratch']
  %s0 = inlined_call_operand.hbm [shape: f32[16,128], index: 0, kind: input, shape index: {}]
  %s1 = inlined_call_operand.hbm [shape: f32[128,128], index: 1, kind: input, shape index: {}]
  %s2 = inlined_call_operand.vmem [shape: f32[1,128], index: 2, kind: input, shape index: {}]
  %s3 = inlined_call_operand.hbm [shape: f32[128,128], index: 3, kind: input, shape index: {}]
  %s4 = inlined_call_operand.vmem [shape: f32[1,128], index: 4, kind: input, shape index: {}]
  %s5 = inlined_call_operand.hbm [shape: f32[16,128], index: 5, kind: output, shape index: {}]
  %s6 = sld [smem:[#allocation0]]
  $region50: #{tpu_custom_call.1} parent=0
    _
  %s8 = ssub.s32 1, %s6
  %s9 = scalar_select 0, %s8, %s6
  $region1: #{tpu_custom_call.1} parent=0
    #allocation2 [shape = 'u8[8192]{0}', space=vmem, size = 0x2000, scoped, tag = 'input window, operand 0, single buffered']
    #allocation3 [shape = 's32[1]{0}', space=sflag, size = 0x4, scoped, tag = 'scoped memory for tpu_custom_call.1']
    #allocation4 [shape = 's32[1]{0}', space=sflag, size = 0x4, scoped, tag = 'scoped memory for tpu_custom_call.1']
    #allocation5 [shape = 'u8[65536]{0}', space=vmem, size = 0x10000, scoped, tag = 'input window, operand 1, single buffered']
    #allocation6 [shape = 's32[1]{0}', space=sflag, size = 0x4, scoped, tag = 'scoped memory for tpu_custom_call.1']
    #allocation7 [shape = 'u8[65536]{0}', space=vmem, size = 0x10000, scoped, tag = 'input window, operand 3, single buffered']
    #allocation8 [shape = 'u8[8192]{0}', space=vmem, size = 0x2000, scoped, tag = 'output window, operand 0, single buffered']
    %10 = vsyncpa [#allocation3], 0
    %11 = vsyncpa [#allocation6], 0
    %12 = vsyncpa [#allocation4], 0
    // Predicated region
    $region2: #{tpu_custom_call.1} parent=1 // pred_check
      _
    $region3: #{tpu_custom_call.1} parent=1 // pred_check_branch
      %14 = sbr.rel (0) target = $region5
    $region4: #{tpu_custom_call.1} parent=1 // pred_region
      %s16 = ssub.s32 256, 256
      %17 = vsyncadd [#allocation3], %s16
      %s18 = sshll.u32 [#allocation2], 4
      %s19 = int_to_ptr.vmem [resolvable:$true] %s18
      %24 = dma.hbm_to_vmem [thread:$0]  %s0, 256, %s19, [#allocation3], 128, 128, 8
    $region5: #{tpu_custom_call.1} parent=1 // pred_fallthru
      _
    // Predicated region
    $region6: #{tpu_custom_call.1} parent=1 // pred_check
      _
    $region7: #{tpu_custom_call.1} parent=1 // pred_check_branch
      %26 = sbr.rel (0) target = $region9
    $region8: #{tpu_custom_call.1} parent=1 // pred_region
      %s28 = ssub.s32 2048, 2048
      %29 = vsyncadd [#allocation6], %s28
      %s30 = sshll.u32 [#allocation5], 4
      %s31 = int_to_ptr.vmem [resolvable:$true] %s30
      %36 = dma.hbm_to_vmem [thread:$0]  %s1, 2048, %s31, [#allocation6], 128, 128, 8
    $region9: #{tpu_custom_call.1} parent=1 // pred_fallthru
      _
    // Predicated region
    $region10: #{tpu_custom_call.1} parent=1 // pred_check
      _
    $region11: #{tpu_custom_call.1} parent=1 // pred_check_branch
      %38 = sbr.rel (0) target = $region13
    $region12: #{tpu_custom_call.1} parent=1 // pred_region
      _
    $region13: #{tpu_custom_call.1} parent=1 // pred_fallthru
      _
    // Predicated region
    $region14: #{tpu_custom_call.1} parent=1 // pred_check
      _
    $region15: #{tpu_custom_call.1} parent=1 // pred_check_branch
      %40 = sbr.rel (0) target = $region17
    $region16: #{tpu_custom_call.1} parent=1 // pred_region
      %s42 = ssub.s32 2048, 2048
      %43 = vsyncadd [#allocation6], %s42
      %s44 = sshll.u32 [#allocation7], 4
      %s45 = int_to_ptr.vmem [resolvable:$true] %s44
      %50 = dma.hbm_to_vmem [thread:$0]  %s3, 2048, %s45, [#allocation6], 128, 128, 8
    $region17: #{tpu_custom_call.1} parent=1 // pred_fallthru
      _
    // Predicated region
    $region18: #{tpu_custom_call.1} parent=1 // pred_check
      _
    $region19: #{tpu_custom_call.1} parent=1 // pred_check_branch
      %52 = sbr.rel (0) target = $region21
    $region20: #{tpu_custom_call.1} parent=1 // pred_region
      _
    $region21: #{tpu_custom_call.1} parent=1 // pred_fallthru
      _
    // Predicated region
    $region22: #{tpu_custom_call.1} parent=1 // pred_check
      _
    $region23: #{tpu_custom_call.1} parent=1 // pred_check_branch
      %54 = sbr.rel (0) target = $region25
    $region24: #{tpu_custom_call.1} parent=1 // pred_region
      %55 = dma.done [#allocation3], 256
    $region25: #{tpu_custom_call.1} parent=1 // pred_fallthru
      _
    // Predicated region
    $region26: #{tpu_custom_call.1} parent=1 // pred_check
      _
    $region27: #{tpu_custom_call.1} parent=1 // pred_check_branch
      %57 = sbr.rel (0) target = $region29
    $region28: #{tpu_custom_call.1} parent=1 // pred_region
      %58 = dma.done [#allocation6], 2048
    $region29: #{tpu_custom_call.1} parent=1 // pred_fallthru
      _
    // Predicated region
    $region30: #{tpu_custom_call.1} parent=1 // pred_check
      _
    $region31: #{tpu_custom_call.1} parent=1 // pred_check_branch
      %60 = sbr.rel (0) target = $region33
    $region32: #{tpu_custom_call.1} parent=1 // pred_region
      %61 = dma.done [#allocation6], 2048
    $region33: #{tpu_custom_call.1} parent=1 // pred_fallthru
      _
    %p62 = scmp.eq.s32.totalorder 0, 0
    // Predicated region
    $region34: #{tpu_custom_call.1} parent=1 // pred_check
      %p63 = pneg %p62
    $region35: #{tpu_custom_call.1} parent=1 // pred_check_branch
      %65 = sbr.rel (%p63) target = $region37
    $region36: #{tpu_custom_call.1} parent=1 // pred_region
      %66 = vst [vmem:[#allocation8] sm:$0xff] 0.0
      %67 = vst [vmem:[#allocation8 + $0x8] sm:$0xff] 0.0
    $region37: #{tpu_custom_call.1} parent=1 // pred_fallthru
      _
    %v68 = vld [vmem:[#allocation2] sm:$0xff]
    %v69 = vld [vmem:[#allocation2 + $0x8] sm:$0xff]
    %v70 = vld [vmem:[#allocation5] sm:$0xff]
    %v71 = vld [vmem:[#allocation5 + $0x8] sm:$0xff]
    %v72 = vld [vmem:[#allocation5 + $0x10] sm:$0xff]
    %v73 = vld [vmem:[#allocation5 + $0x18] sm:$0xff]
    %v74 = vld [vmem:[#allocation5 + $0x20] sm:$0xff]
    %v75 = vld [vmem:[#allocation5 + $0x28] sm:$0xff]
    %v76 = vld [vmem:[#allocation5 + $0x30] sm:$0xff]
    %v77 = vld [vmem:[#allocation5 + $0x38] sm:$0xff]
    %v78 = vld [vmem:[#allocation5 + $0x40] sm:$0xff]
    %v79 = vld [vmem:[#allocation5 + $0x48] sm:$0xff]
    %v80 = vld [vmem:[#allocation5 + $0x50] sm:$0xff]
    %v81 = vld [vmem:[#allocation5 + $0x58] sm:$0xff]
    %v82 = vld [vmem:[#allocation5 + $0x60] sm:$0xff]
    %v83 = vld [vmem:[#allocation5 + $0x68] sm:$0xff]
    %v84 = vld [vmem:[#allocation5 + $0x70] sm:$0xff]
    %v85 = vld [vmem:[#allocation5 + $0x78] sm:$0xff]
    %v86 = vld [vmem:[%s2] sm:$0x1]
    %v88 = vlaneseq
    %v89 = vshrl.u32 %v88, 7
    %v90 = vsub.s32 0, %v89
    %v91 = vrot.slane %v86, %v90
    %93 = vmatprep.subr.mxu0 0.0
    %94 = vmatpush1.msra.mxu0 %v70
    %95 = vmatprep.subr.mxu0 0.0
    %96 = vmatpush1.msra.mxu0 %v71
    %97 = vmatprep.subr.mxu0 0.0
    %98 = vmatpush1.msra.mxu0 %v72
    %99 = vmatprep.subr.mxu0 0.0
    %100 = vmatpush1.msra.mxu0 %v73
    %101 = vmatprep.subr.mxu0 0.0
    %102 = vmatpush1.msra.mxu0 %v74
    %103 = vmatprep.subr.mxu0 0.0
    %104 = vmatpush1.msra.mxu0 %v75
    %105 = vmatprep.subr.mxu0 0.0
    %106 = vmatpush1.msra.mxu0 %v76
    %107 = vmatprep.subr.mxu0 0.0
    %108 = vmatpush1.msra.mxu0 %v77
    %109 = vmatprep.subr.mxu0 0.0
    %110 = vmatpush1.msra.mxu0 %v78
    %111 = vmatprep.subr.mxu0 0.0
    %112 = vmatpush1.msra.mxu0 %v79
    %113 = vmatprep.subr.mxu0 0.0
    %114 = vmatpush1.msra.mxu0 %v80
    %115 = vmatprep.subr.mxu0 0.0
    %116 = vmatpush1.msra.mxu0 %v81
    %117 = vmatprep.subr.mxu0 0.0
    %118 = vmatpush1.msra.mxu0 %v82
    %119 = vmatprep.subr.mxu0 0.0
    %120 = vmatpush1.msra.mxu0 %v83
    %121 = vmatprep.subr.mxu0 0.0
    %122 = vmatpush1.msra.mxu0 %v84
    %123 = vmatprep.subr.mxu0 0.0
    %124 = vmatpush1.msra.mxu0 %v85
    %125 = vmatprep.subr.mxu0 0.0
    %126 = vmatpush1.msra.mxu0 0.0
    %127 = vmatprep.subr.mxu0 0.0
    %128 = vmatpush1.msra.mxu0 0.0
    %129 = vmatprep.subr.mxu0 0.0
    %130 = vmatpush1.msra.mxu0 0.0
    %131 = vmatprep.subr.mxu0 0.0
    %132 = vmatpush1.msra.mxu0 0.0
    %133 = vmatprep.subr.mxu0 0.0
    %134 = vmatpush1.msra.mxu0 0.0
    %135 = vmatprep.subr.mxu0 0.0
    %136 = vmatpush1.msra.mxu0 0.0
    %137 = vmatprep.subr.mxu0 0.0
    %138 = vmatpush1.msra.mxu0 0.0
    %139 = vmatprep.subr.mxu0 0.0
    %140 = vmatpush1.msra.mxu0 0.0
    %141 = vmatprep.subr.mxu0 0.0
    %142 = vmatpush1.msra.mxu0 0.0
    %143 = vmatprep.subr.mxu0 0.0
    %144 = vmatpush1.msra.mxu0 0.0
    %145 = vmatprep.subr.mxu0 0.0
    %146 = vmatpush1.msra.mxu0 0.0
    %147 = vmatprep.subr.mxu0 0.0
    %148 = vmatpush1.msra.mxu0 0.0
    %149 = vmatprep.subr.mxu0 0.0
    %150 = vmatpush1.msra.mxu0 0.0
    %151 = vmatprep.subr.mxu0 0.0
    %152 = vmatpush1.msra.mxu0 0.0
    %153 = vmatprep.subr.mxu0 0.0
    %154 = vmatpush1.msra.mxu0 0.0
    %155 = vmatprep.subr.mxu0 0.0
    %156 = vmatpush1.msra.mxu0 0.0
    %157 = vmatprep.mubr.f32.mxu0 0.0
    %158 = vmatmul.mubr.f32.gmra.mrb[0].mxu0 %v68
    %v159 = vpop.f32.mrb[0].mxu0
    %v160 = vadd.f32 %v91, %v159
    %v161 = vpop.f32.mrb[0].mxu0
    %162 = vmatprep.mubr.f32.mxu0 0.0
    %163 = vmatmul.mubr.f32.gmra.mrb[0].mxu0 %v69
    %v164 = vpop.f32.mrb[0].mxu0
    %v165 = vadd.f32 %v91, %v164
    %v166 = vpop.f32.mrb[0].mxu0
    %167 = vdwg.mxu0
    %v168 = vmax.f32 %v160, 0.0
    %v169 = vmax.f32 %v165, 0.0
    %v170 = vld [vmem:[#allocation8] sm:$0xff]
    %v171 = vld [vmem:[#allocation8 + $0x8] sm:$0xff]
    %v172 = vld [vmem:[#allocation7] sm:$0xff]
    %v173 = vld [vmem:[#allocation7 + $0x8] sm:$0xff]
    %v174 = vld [vmem:[#allocation7 + $0x10] sm:$0xff]
    %v175 = vld [vmem:[#allocation7 + $0x18] sm:$0xff]
    %v176 = vld [vmem:[#allocation7 + $0x20] sm:$0xff]
    %v177 = vld [vmem:[#allocation7 + $0x28] sm:$0xff]
    %v178 = vld [vmem:[#allocation7 + $0x30] sm:$0xff]
    %v179 = vld [vmem:[#allocation7 + $0x38] sm:$0xff]
    %v180 = vld [vmem:[#allocation7 + $0x40] sm:$0xff]
    %v181 = vld [vmem:[#allocation7 + $0x48] sm:$0xff]
    %v182 = vld [vmem:[#allocation7 + $0x50] sm:$0xff]
    %v183 = vld [vmem:[#allocation7 + $0x58] sm:$0xff]
    %v184 = vld [vmem:[#allocation7 + $0x60] sm:$0xff]
    %v185 = vld [vmem:[#allocation7 + $0x68] sm:$0xff]
    %v186 = vld [vmem:[#allocation7 + $0x70] sm:$0xff]
    %v187 = vld [vmem:[#allocation7 + $0x78] sm:$0xff]
    %188 = vmatprep.subr.mxu0 0.0
    %189 = vmatpush1.msra.mxu0 %v172
    %190 = vmatprep.subr.mxu0 0.0
    %191 = vmatpush1.msra.mxu0 %v173
    %192 = vmatprep.subr.mxu0 0.0
    %193 = vmatpush1.msra.mxu0 %v174
    %194 = vmatprep.subr.mxu0 0.0
    %195 = vmatpush1.msra.mxu0 %v175
    %196 = vmatprep.subr.mxu0 0.0
    %197 = vmatpush1.msra.mxu0 %v176
    %198 = vmatprep.subr.mxu0 0.0
    %199 = vmatpush1.msra.mxu0 %v177
    %200 = vmatprep.subr.mxu0 0.0
    %201 = vmatpush1.msra.mxu0 %v178
    %202 = vmatprep.subr.mxu0 0.0
    %203 = vmatpush1.msra.mxu0 %v179
    %204 = vmatprep.subr.mxu0 0.0
    %205 = vmatpush1.msra.mxu0 %v180
    %206 = vmatprep.subr.mxu0 0.0
    %207 = vmatpush1.msra.mxu0 %v181
    %208 = vmatprep.subr.mxu0 0.0
    %209 = vmatpush1.msra.mxu0 %v182
    %210 = vmatprep.subr.mxu0 0.0
    %211 = vmatpush1.msra.mxu0 %v183
    %212 = vmatprep.subr.mxu0 0.0
    %213 = vmatpush1.msra.mxu0 %v184
    %214 = vmatprep.subr.mxu0 0.0
    %215 = vmatpush1.msra.mxu0 %v185
    %216 = vmatprep.subr.mxu0 0.0
    %217 = vmatpush1.msra.mxu0 %v186
    %218 = vmatprep.subr.mxu0 0.0
    %219 = vmatpush1.msra.mxu0 %v187
    %220 = vmatprep.subr.mxu0 0.0
    %221 = vmatpush1.msra.mxu0 0.0
    %222 = vmatprep.subr.mxu0 0.0
    %223 = vmatpush1.msra.mxu0 0.0
    %224 = vmatprep.subr.mxu0 0.0
    %225 = vmatpush1.msra.mxu0 0.0
    %226 = vmatprep.subr.mxu0 0.0
    %227 = vmatpush1.msra.mxu0 0.0
    %228 = vmatprep.subr.mxu0 0.0
    %229 = vmatpush1.msra.mxu0 0.0
    %230 = vmatprep.subr.mxu0 0.0
    %231 = vmatpush1.msra.mxu0 0.0
    %232 = vmatprep.subr.mxu0 0.0
    %233 = vmatpush1.msra.mxu0 0.0
    %234 = vmatprep.subr.mxu0 0.0
    %235 = vmatpush1.msra.mxu0 0.0
    %236 = vmatprep.subr.mxu0 0.0
    %237 = vmatpush1.msra.mxu0 0.0
    %238 = vmatprep.subr.mxu0 0.0
    %239 = vmatpush1.msra.mxu0 0.0
    %240 = vmatprep.subr.mxu0 0.0
    %241 = vmatpush1.msra.mxu0 0.0
    %242 = vmatprep.subr.mxu0 0.0
    %243 = vmatpush1.msra.mxu0 0.0
    %244 = vmatprep.subr.mxu0 0.0
    %245 = vmatpush1.msra.mxu0 0.0
    %246 = vmatprep.subr.mxu0 0.0
    %247 = vmatpush1.msra.mxu0 0.0
    %248 = vmatprep.subr.mxu0 0.0
    %249 = vmatpush1.msra.mxu0 0.0
    %250 = vmatprep.subr.mxu0 0.0
    %251 = vmatpush1.msra.mxu0 0.0
    %252 = vmatprep.mubr.f32.mxu0 0.0
    %253 = vmatmul.mubr.f32.gmra.mrb[0].mxu0 %v168
    %v254 = vpop.f32.mrb[0].mxu0
    %v255 = vadd.f32 0.0, %v254
    %v256 = vpop.f32.mrb[0].mxu0
    %257 = vmatprep.mubr.f32.mxu0 0.0
    %258 = vmatmul.mubr.f32.gmra.mrb[0].mxu0 %v169
    %v259 = vpop.f32.mrb[0].mxu0
    %v260 = vadd.f32 0.0, %v259
    %v261 = vpop.f32.mrb[0].mxu0
    %262 = vdwg.mxu0
    %v263 = vadd.f32 %v170, %v255
    %v264 = vadd.f32 %v171, %v260
    %265 = vst [vmem:[#allocation8] sm:$0xff] %v263
    %266 = vst [vmem:[#allocation8 + $0x8] sm:$0xff] %v264
    // Predicated region
    $region38: #{tpu_custom_call.1} parent=1 // pred_check
      %p267 = pneg %p62
    $region39: #{tpu_custom_call.1} parent=1 // pred_check_branch
      %269 = sbr.rel (%p267) target = $region41
    $region40: #{tpu_custom_call.1} parent=1 // pred_region
      %v270 = vld [vmem:[#allocation8] sm:$0xff]
      %v271 = vld [vmem:[#allocation8 + $0x8] sm:$0xff]
      %v272 = vld [vmem:[%s4] sm:$0x1]
      %v274 = vlaneseq
      %v275 = vshrl.u32 %v274, 7
      %v276 = vsub.s32 0, %v275
      %v277 = vrot.slane %v272, %v276
      %v279 = vadd.f32 %v270, %v277
      %v280 = vadd.f32 %v271, %v277
      %281 = vst [vmem:[#allocation8] sm:$0xff] %v279
      %282 = vst [vmem:[#allocation8 + $0x8] sm:$0xff] %v280
    $region41: #{tpu_custom_call.1} parent=1 // pred_fallthru
      _
    // Predicated region
    $region42: #{tpu_custom_call.1} parent=1 // pred_check
      _
    $region43: #{tpu_custom_call.1} parent=1 // pred_check_branch
      %284 = sbr.rel (0) target = $region45
    $region44: #{tpu_custom_call.1} parent=1 // pred_region
      %s286 = ssub.s32 256, 256
      %287 = vsyncadd [#allocation4], %s286
      %s288 = sshll.u32 [#allocation8], 4
      %s289 = int_to_ptr.vmem [resolvable:$true] %s288
      %294 = dma.vmem_to_hbm [thread:$0]  %s289, 256, %s5, [#allocation4], 128, 128, 8
    $region45: #{tpu_custom_call.1} parent=1 // pred_fallthru
      _
    // Predicated region
    $region46: #{tpu_custom_call.1} parent=1 // pred_check
      _
    $region47: #{tpu_custom_call.1} parent=1 // pred_check_branch
      %296 = sbr.rel (0) target = $region49
    $region48: #{tpu_custom_call.1} parent=1 // pred_region
      %297 = dma.done [#allocation4], 256
    $region49: #{tpu_custom_call.1} parent=1 // pred_fallthru
      _
    %298 = vsyncpa [#allocation3], 1
    %299 = vsyncpa [#allocation6], 1
    %300 = vsyncpa [#allocation4], 1

</llo_original>
